<compile_context>
chip_gen: v5e
topology: v5e:2x2
jax: 0.10.0
libtpu: 0.0.40
codegen_flags: <defaults>
</compile_context>

<pallas_src>
import functools

import jax
import jax.numpy as jnp
from jax.experimental import pallas as pl
from jax.experimental.pallas import tpu as pltpu

_LANE = 128
_NEG_INF = -1e30
_VMEM_BUDGET = 24 * 1024 * 1024  # conservative: fits v7x 32 MiB scoped default


def _tc_count():
    """Best-effort TensorCore-per-chip count (2 on v7x, 1 on v5e/v6e)."""
    try:
        info = pltpu.get_tpu_info()
        for attr in ("num_tensorcores", "tensorcore_count", "num_cores",
                     "cores_per_chip"):
            v = getattr(info, attr, None)
            if isinstance(v, int) and v > 0:
                return v
    except Exception:
        pass
    try:
        kind = jax.devices()[0].device_kind.lower()
        if "v7" in kind:
            return 2
    except Exception:
        pass
    return 1


def _pick_row_tile(N, H, C, Cp, tm):
    """Pick a balanced, VMEM-safe row tile (multiple of 8)."""
    n8 = pl.cdiv(N, 8) * 8
    # VMEM cap: double-buffered x tile + out tile + (double-buffered) weight/bias,
    # conservatively counted in f32.
    weight_bytes = 2 * (H * Cp + Cp) * 4
    per_row = 2 * (H + C) * 4
    tm_cap = max(8, ((_VMEM_BUDGET - weight_bytes) // per_row) // 8 * 8)
    tm = min(tm, tm_cap, n8)
    # Choose the number of row blocks first, then split evenly (balanced blocks),
    # forcing >=1 block per TensorCore only on multi-TC chips (v7x).
    g = pl.cdiv(n8, tm)
    g = max(g, min(_tc_count(), n8 // 8))
    tm_eff = pl.cdiv(pl.cdiv(n8, g), 8) * 8
    return tm_eff


def _cat_classifier_kernel(x_ref, w_ref, b_ref, o_ref):
    # x_ref: (tm, H)  w_ref: (H, Cp)  b_ref: (1, Cp)  o_ref: (tm, C)  (C <= Cp)
    logits = jnp.dot(x_ref[...], w_ref[...], preferred_element_type=jnp.float32)
    logits = logits + b_ref[...]
    # Numerically-stable softmax over the lane-dense padded class dim; padded
    # columns carry bias = -1e30 -> exp() == 0 -> denominator is exact.
    m = jnp.max(logits, axis=-1, keepdims=True)
    e = jnp.exp(logits - m)
    denom = jnp.sum(e, axis=-1, keepdims=True)
    # approx reciprocal -> EUP slot; perturbs probabilities at ~1e-4..1e-3.
    probs = e * pl.reciprocal(denom, approx=True)
    # store only the real n_cat columns (cuts output HBM bytes when C << 128)
    o_ref[...] = probs[:, : o_ref.shape[1]].astype(o_ref.dtype)


def prepare_classifier_params(weight_t, bias=None):
    """One-time (per model) parameter prep: pad the class dim to a lane-dense
    multiple of 128.  weight_t: (H, C) (i.e. torch Linear weight transposed),
    bias: (C,) or None.  Returns (w_p, b_p) to pass into the forward."""
    H, C = weight_t.shape
    Cp = pl.cdiv(max(C, 1), _LANE) * _LANE
    w_p = jnp.zeros((H, Cp), weight_t.dtype).at[:, :C].set(weight_t)
    b_real = bias if bias is not None else jnp.zeros((C,), jnp.float32)
    b_p = jnp.full((1, Cp), _NEG_INF, dtype=jnp.float32)
    b_p = b_p.at[0, :C].set(b_real.astype(jnp.float32))
    return jax.device_put(w_p), jax.device_put(b_p)


@functools.partial(jax.jit, static_argnames=("n_cat", "tm"))
def eds_concept_classifier_fwd(packed_data, w_p, b_p, *, n_cat, tm=1024):
    """packed_data: (N, H), w_p: (H, Cp) padded weight, b_p: (1, Cp) padded bias.
    Returns (N, n_cat) softmax probabilities."""
    N, H = packed_data.shape
    Cp = w_p.shape[1]
    C = int(n_cat)
    assert 0 < C <= Cp

    # TODO(synk): for tiny N on v5e a plain-XLA softmax(x @ W + b) fallback can
    # beat the pallas_call fixed cost; left to the caller to dispatch.

    tm_eff = _pick_row_tile(N, H, C, Cp, tm)
    grid = pl.cdiv(N, tm_eff)  # partial boundary block handled by Pallas masking

    w_spec = pl.BlockSpec((H, Cp), lambda i: (0, 0))      # full weight, resident
    b_spec = pl.BlockSpec((1, Cp), lambda i: (0, 0))      # padded bias, resident
    if H * Cp * 4 >= (2 << 20):
        # Large grid-invariant weight: single-buffer it so it is not
        # double-buffered (halves its VMEM footprint; matters on v7x 64 MiB).
        w_spec = pl.BlockSpec((H, Cp), lambda i: (0, 0), pipeline_mode=pl.Buffered(1))
        b_spec = pl.BlockSpec((1, Cp), lambda i: (0, 0), pipeline_mode=pl.Buffered(1))

    out = pl.pallas_call(
        _cat_classifier_kernel,
        out_shape=jax.ShapeDtypeStruct((N, C), packed_data.dtype),
        grid_spec=pltpu.PrefetchScalarGridSpec(
            num_scalar_prefetch=0,
            grid=(grid,),
            in_specs=[
                pl.BlockSpec((tm_eff, H), lambda i: (i, 0)),  # x tile (streamed)
                w_spec,
                b_spec,
            ],
            # full last dim (== C) is exempt from the 128-lane rule
            out_specs=pl.BlockSpec((tm_eff, C), lambda i: (i, 0)),
        ),
        compiler_params=pltpu.CompilerParams(
            dimension_semantics=("parallel",),
            vmem_limit_bytes=32 * 1024 * 1024,
        ),
    )(packed_data, w_p, b_p)

    return out


def eds_concept_classifier_packed(packed_data, batch_sizes, w_p, b_p, *, n_cat):
    """Mirrors forward(): returns (cat_prob_packed_data, batch_sizes)."""
    cat_prob = eds_concept_classifier_fwd(packed_data, w_p, b_p, n_cat=n_cat)
    # TODO(synk): PackedSequence is a PyTorch container; we return (data, batch_sizes).
    return (cat_prob, batch_sizes)


if __name__ == "__main__":
    key = jax.random.PRNGKey(0)
    k1, k2, k3 = jax.random.split(key, 3)

    # small shapes consistent with the module:
    #   total packed tokens N = 16, concept_src_enc_size H = 32, n_cat C = 8
    N, H, C = 16, 32, 8
    packed_data = jax.random.normal(k1, (N, H), dtype=jnp.float32)
    # torch Linear weight is (C, H); we carry the transpose (H, C)
    weight_t = jax.random.normal(k2, (H, C), dtype=jnp.float32) * 0.1
    bias = jax.random.normal(k3, (C,), dtype=jnp.float32) * 0.01
    # synthetic batch_sizes metadata for the packed sequence (sums to N)
    batch_sizes = jnp.array([4, 4, 3, 2, 2, 1], dtype=jnp.int32)

    # one-time parameter prep (padding hoisted out of the per-call path)
    w_p, b_p = prepare_classifier_params(weight_t, bias)

    cat_prob, bs = eds_concept_classifier_packed(
        packed_data, batch_sizes, w_p, b_p, n_cat=C)
    cat_prob = jax.block_until_ready(cat_prob)

    # sanity: rows of a softmax sum to ~1 (approx reciprocal -> loose tol)
    row_sums = jnp.sum(cat_prob, axis=-1)
    assert cat_prob.shape == (N, C)
    assert bool(jnp.all(jnp.abs(row_sums - 1.0) < 5e-3))

    # cross-check against plain-JAX reference (approx reciprocal: ~1e-3 tol)
    ref = jax.nn.softmax(packed_data @ weight_t + bias, axis=-1)
    assert bool(jnp.all(jnp.abs(cat_prob - ref) < 2e-3))

    # also exercise a non-multiple-of-tile N (partial boundary block path)
    N2 = 37
    pd2 = jax.random.normal(k1, (N2, H), dtype=jnp.float32)
    cp2 = jax.block_until_ready(
        eds_concept_classifier_fwd(pd2, w_p, b_p, n_cat=C))
    ref2 = jax.nn.softmax(pd2 @ weight_t + bias, axis=-1)
    assert cp2.shape == (N2, C)
    assert bool(jnp.all(jnp.abs(cp2 - ref2) < 2e-3))

    print("KERNEL_OK")
</pallas_src>

<mosaic_0001>
module attributes {stable_mosaic.version = 11 : i64} {
  func.func @_cat_classifier_kernel(%arg0: i32, %arg1: memref<16x32xf32, #tpu.memory_space<vmem>>, %arg2: memref<32x128xf32, #tpu.memory_space<vmem>>, %arg3: memref<1x128xf32, #tpu.memory_space<vmem>>, %arg4: memref<16x8xf32, #tpu.memory_space<vmem>>) attributes {dimension_semantics = [#tpu.dimension_semantics<parallel>], iteration_bounds = array<i64: 1>, scalar_prefetch = 0 : i64, scratch_operands = 0 : i64, tpu.core_type = #tpu.core_type<tc>, window_params = [{transform_indices = @transform_0, window_bounds = array<i64: 16, 32>}, {pipeline_mode = #tpu.pipeline_mode<synchronous>, transform_indices = @transform_1, window_bounds = array<i64: 32, 128>}, {pipeline_mode = #tpu.pipeline_mode<synchronous>, transform_indices = @transform_2, window_bounds = array<i64: 1, 128>}, {transform_indices = @transform_3, window_bounds = array<i64: 16, 8>}]} {
    %c0 = arith.constant 0 : index
    %c0_0 = arith.constant 0 : index
    %0 = vector.load %arg1[%c0, %c0_0] : memref<16x32xf32, #tpu.memory_space<vmem>>, vector<16x32xf32>
    %c0_1 = arith.constant 0 : index
    %c0_2 = arith.constant 0 : index
    %1 = vector.load %arg2[%c0_1, %c0_2] : memref<32x128xf32, #tpu.memory_space<vmem>>, vector<32x128xf32>
    %cst = arith.constant dense<0.000000e+00> : vector<16x128xf32>
    %2 = tpu.matmul %0, %1, %cst {dimension_numbers = #tpu.dot_dimension_numbers<[1], [0], [0], [1], [0, 0, 1, 1], [], []>} : vector<16x32xf32>, vector<32x128xf32>, vector<16x128xf32> -> vector<16x128xf32>
    %c0_3 = arith.constant 0 : index
    %c0_4 = arith.constant 0 : index
    %3 = vector.load %arg3[%c0_3, %c0_4] : memref<1x128xf32, #tpu.memory_space<vmem>>, vector<1x128xf32>
    %4 = vector.broadcast %3 : vector<1x128xf32> to vector<16x128xf32>
    %5 = arith.addf %2, %4 : vector<16x128xf32>
    %cst_5 = arith.constant dense<0xFF800000> : vector<16xf32>
    %6 = vector.multi_reduction <maximumf>, %5, %cst_5 [1] : vector<16x128xf32> to vector<16xf32>
    %7 = vector.shape_cast %6 : vector<16xf32> to vector<16x1xf32>
    %8 = vector.broadcast %7 : vector<16x1xf32> to vector<16x128xf32>
    %9 = arith.subf %5, %8 : vector<16x128xf32>
    %10 = math.exp %9 : vector<16x128xf32>
    %cst_6 = arith.constant dense<0.000000e+00> : vector<16xf32>
    %11 = vector.multi_reduction <add>, %10, %cst_6 [1] : vector<16x128xf32> to vector<16xf32>
    %12 = vector.shape_cast %11 : vector<16xf32> to vector<16x1xf32>
    %13 = tpu.reciprocal %12 {approx = true} : vector<16x1xf32> -> vector<16x1xf32>
    %14 = vector.broadcast %13 : vector<16x1xf32> to vector<16x128xf32>
    %15 = arith.mulf %10, %14 : vector<16x128xf32>
    %16 = vector.extract_strided_slice %15 {offsets = [0, 0], sizes = [16, 8], strides = [1, 1]} : vector<16x128xf32> to vector<16x8xf32>
    %c0_7 = arith.constant 0 : index
    %c0_8 = arith.constant 0 : index
    %17 = vector.load %arg4[%c0_7, %c0_8] : memref<16x8xf32, #tpu.memory_space<vmem>>, vector<16x8xf32>
    tpu.vector_store %arg4[%c0_7, %c0_8], %16 {strides = array<i32>} : memref<16x8xf32, #tpu.memory_space<vmem>>, vector<16x8xf32>,
    return
  }
  func.func @transform_0(%arg0: i32) -> (i32, i32) {
    %c0_i32 = arith.constant 0 : i32
    %c0_i32_0 = arith.constant 0 : i32
    return %arg0, %c0_i32 : i32, i32
  }
  func.func @transform_1(%arg0: i32) -> (i32, i32) {
    %c0_i32 = arith.constant 0 : i32
    %c0_i32_0 = arith.constant 0 : i32
    %c0_i32_1 = arith.constant 0 : i32
    return %c0_i32, %c0_i32_0 : i32, i32
  }
  func.func @transform_2(%arg0: i32) -> (i32, i32) {
    %c0_i32 = arith.constant 0 : i32
    %c0_i32_0 = arith.constant 0 : i32
    %c0_i32_1 = arith.constant 0 : i32
    return %c0_i32, %c0_i32_0 : i32, i32
  }
  func.func @transform_3(%arg0: i32) -> (i32, i32) {
    %c0_i32 = arith.constant 0 : i32
    %c0_i32_0 = arith.constant 0 : i32
    return %arg0, %c0_i32 : i32, i32
  }
}

</mosaic_0001>

<llo_original>
// kernel: eds_concept_classifier_fwd.1
$region0: #{eds_concept_classifier_fwd.1}
  #allocation0 [shape = 'u32[]', space=smem, size = 0x4, offset = 0x4, fixed_abs, tag = 'smem constant byte address 0x4 - core index']
  #allocation1 [shape = 'u32[72,128]{1,0:T(1,128)}', space=vmem, size = 0x9000, scoped, tag = 'internal scratch']
  %s0 = inlined_call_operand.hbm [shape: f32[16,32], index: 0, kind: input, shape index: {}]
  %s1 = inlined_call_operand.hbm [shape: f32[32,128], index: 1, kind: input, shape index: {}]
  %s2 = inlined_call_operand.vmem [shape: f32[1,128], index: 2, kind: input, shape index: {}]
  %s3 = inlined_call_operand.vmem [shape: f32[16,8], index: 3, kind: output, shape index: {}]
  %s4 = sld [smem:[#allocation0]]
  $region30: #{eds_concept_classifier_fwd.1} parent=0
    _
  %s6 = ssub.s32 1, %s4
  %s7 = scalar_select 0, %s6, %s4
  $region1: #{eds_concept_classifier_fwd.1} parent=0
    #allocation2 [shape = 'u8[8192]{0}', space=vmem, size = 0x2000, scoped, tag = 'input window, operand 0, single buffered']
    #allocation3 [shape = 's32[1]{0}', space=sflag, size = 0x4, scoped, tag = 'scoped memory for eds_concept_classifier_fwd.1']
    #allocation4 [shape = 'u8[16384]{0}', space=vmem, size = 0x4000, scoped, tag = 'input window, operand 1, single buffered']
    #allocation5 [shape = 's32[1]{0}', space=sflag, size = 0x4, scoped, tag = 'scoped memory for eds_concept_classifier_fwd.1']
    %8 = vsyncpa [#allocation3], 0
    %9 = vsyncpa [#allocation5], 0
    // Predicated region
    $region2: #{eds_concept_classifier_fwd.1} parent=1 // pred_check
      _
    $region3: #{eds_concept_classifier_fwd.1} parent=1 // pred_check_branch
      %11 = sbr.rel (0) target = $region5
    $region4: #{eds_concept_classifier_fwd.1} parent=1 // pred_region
      %13 = vsyncadd [#allocation3], 0
      %s14 = sshll.u32 %s0, 4
      %s15 = int_to_ptr.hbm [resolvable:$true] %s14
      %s16 = sshll.u32 [#allocation2], 4
      %s17 = int_to_ptr.vmem [resolvable:$true] %s16
      %22 = dma.hbm_to_vmem [thread:$0]  %s15, 256, %s17, [#allocation3], 128, 128, 8
    $region5: #{eds_concept_classifier_fwd.1} parent=1 // pred_fallthru
      _
    // Predicated region
    $region6: #{eds_concept_classifier_fwd.1} parent=1 // pred_check
      _
    $region7: #{eds_concept_classifier_fwd.1} parent=1 // pred_check_branch
      %24 = sbr.rel (0) target = $region9
    $region8: #{eds_concept_classifier_fwd.1} parent=1 // pred_region
      %26 = vsyncadd [#allocation5], 0
      %s27 = sshll.u32 %s1, 4
      %s28 = int_to_ptr.hbm [resolvable:$true] %s27
      %s29 = sshll.u32 [#allocation4], 4
      %s30 = int_to_ptr.vmem [resolvable:$true] %s29
      %35 = dma.hbm_to_vmem [thread:$0]  %s28, 512, %s30, [#allocation5], 128, 128, 8
    $region9: #{eds_concept_classifier_fwd.1} parent=1 // pred_fallthru
      _
    // Predicated region
    $region10: #{eds_concept_classifier_fwd.1} parent=1 // pred_check
      _
    $region11: #{eds_concept_classifier_fwd.1} parent=1 // pred_check_branch
      %37 = sbr.rel (0) target = $region13
    $region12: #{eds_concept_classifier_fwd.1} parent=1 // pred_region
      _
    $region13: #{eds_concept_classifier_fwd.1} parent=1 // pred_fallthru
      _
    // Predicated region
    $region14: #{eds_concept_classifier_fwd.1} parent=1 // pred_check
      _
    $region15: #{eds_concept_classifier_fwd.1} parent=1 // pred_check_branch
      %39 = sbr.rel (0) target = $region17
    $region16: #{eds_concept_classifier_fwd.1} parent=1 // pred_region
      %41 = dma.done [#allocation3], 256
    $region17: #{eds_concept_classifier_fwd.1} parent=1 // pred_fallthru
      _
    // Predicated region
    $region18: #{eds_concept_classifier_fwd.1} parent=1 // pred_check
      _
    $region19: #{eds_concept_classifier_fwd.1} parent=1 // pred_check_branch
      %43 = sbr.rel (0) target = $region21
    $region20: #{eds_concept_classifier_fwd.1} parent=1 // pred_region
      %45 = dma.done [#allocation5], 512
    $region21: #{eds_concept_classifier_fwd.1} parent=1 // pred_fallthru
      _
    %v46 = vld [vmem:[#allocation2] sm:$0xff]
    %v47 = vld [vmem:[#allocation2 + $0x8] sm:$0xff]
    %v48 = vld [vmem:[#allocation4] sm:$0xff]
    %v49 = vld [vmem:[#allocation4 + $0x8] sm:$0xff]
    %v50 = vld [vmem:[#allocation4 + $0x10] sm:$0xff]
    %v51 = vld [vmem:[#allocation4 + $0x18] sm:$0xff]
    %v52 = vld [vmem:[%s2] sm:$0x1]
    %v54 = vperm.slane %v52, 0
    %vm56 = vcmask 261120
    %v58 = vsel %vm56, %v46, 0
    %v61 = vsel %vm56, %v47, 0
    %63 = vmatpush.msra.mxu0 0.0
    %64 = vmatpush.msra.mxu0 0.0
    %65 = vmatpush.msra.mxu0 0.0
    %66 = vmatpush.msra.mxu0 0.0
    %67 = vmatpush.msra.mxu0 0.0
    %68 = vmatpush.msra.mxu0 0.0
    %69 = vmatpush.msra.mxu0 0.0
    %70 = vmatpush.msra.mxu0 0.0
    %71 = vmatpush.msra.mxu0 0.0
    %72 = vmatpush.msra.mxu0 0.0
    %73 = vmatpush.msra.mxu0 0.0
    %74 = vmatpush.msra.mxu0 0.0
    %75 = vmatpush.msra.mxu0 %v51
    %76 = vmatpush.msra.mxu0 %v50
    %77 = vmatpush.msra.mxu0 %v49
    %78 = vmatpush.msra.mxu0 %v48
    %79 = vmatmul.f32.gmra.mxu0 %v58
    %v80 = vpop.f32.mrf.mxu0
    %v81 = vadd.f32 %v54, %v80
    %82 = vmatmul.f32.gmra.mxu0 %v61
    %v83 = vpop.f32.mrf.mxu0
    %v84 = vadd.f32 %v54, %v83
    %85 = vdwg.mxu0
    %86 = vmax.xlane.f32.xlu0 %v81
    %v87 = vpop.xlane.xlu0 %86
    %88 = vmax.xlane.f32.xlu0 %v84
    %v89 = vpop.xlane.xlu0 %88
    %v90 = vsub.f32 %v81, %v87
    %v91 = vsub.f32 %v84, %v89
    %v92 = vmul.f32 %v90, 1.442695
    %v93 = vpow.pop %v92
    %v94 = vmul.f32 %v91, 1.442695
    %v95 = vpow.pop %v94
    %96 = vadd.xlane.f32.xlu0 %v93
    %v97 = vpop.xlane.xlu0 %96
    %98 = vadd.xlane.f32.xlu0 %v95
    %v99 = vpop.xlane.xlu0 %98
    %v100 = vrcp.pop %v97
    %v101 = vrcp.pop %v99
    %v102 = vmul.f32 %v93, %v100
    %v103 = vmul.f32 %v95, %v101
    %vm104 = vcmask 64512
    %105 = vst.msk [vmem:[%s3] sm:$0xff] %vm104, %v102
    %106 = vst.msk [vmem:[%s3 + $0x8] sm:$0xff] %vm104, %v103
    // Predicated region
    $region22: #{eds_concept_classifier_fwd.1} parent=1 // pred_check
      _
    $region23: #{eds_concept_classifier_fwd.1} parent=1 // pred_check_branch
      %108 = sbr.rel (0) target = $region25
    $region24: #{eds_concept_classifier_fwd.1} parent=1 // pred_region
      _
    $region25: #{eds_concept_classifier_fwd.1} parent=1 // pred_fallthru
      _
    // Predicated region
    $region26: #{eds_concept_classifier_fwd.1} parent=1 // pred_check
      _
    $region27: #{eds_concept_classifier_fwd.1} parent=1 // pred_check_branch
      %110 = sbr.rel (0) target = $region29
    $region28: #{eds_concept_classifier_fwd.1} parent=1 // pred_region
      _
    $region29: #{eds_concept_classifier_fwd.1} parent=1 // pred_fallthru
      _
    %111 = vsyncpa [#allocation3], 1
    %112 = vsyncpa [#allocation5], 1

</llo_original>
